<compile_context>
chip_gen: v6e
topology: v6e:2x2x1
jax: 0.10.0
libtpu: 0.0.40
codegen_flags: <defaults>
</compile_context>

<pallas_src>
import jax
import jax.numpy as jnp
from jax.experimental import pallas as pl
from jax.experimental.pallas import tpu as pltpu


# ----------------------------- helpers ------------------------------------ #

def _cdiv(a, b):
    return (a + b - 1) // b


def _round_up(x, m):
    return _cdiv(x, m) * m


def _vmem_capacity_bytes():
    """Physical VMEM of the attached TPU; conservative 64 MiB (v7x) fallback."""
    try:
        cap = getattr(pltpu.get_tpu_info(), "vmem_capacity_bytes", None)
        if cap:
            return int(cap)
    except Exception:
        pass
    return 64 * 1024 * 1024


# ----------------------------- kernels ------------------------------------ #

def _make_single_pass_kernel(tm, tv, nv, v_real, v_pad):
    """Resident-output kernel over grid (token_tile i, vocab_tile v)."""
    needs_mask = v_pad != v_real

    if nv == 1:
        def kernel(x_ref, w_ref, o_ref, m_sc, l_sc):
            del m_sc, l_sc  # unused in the single-vocab-tile case
            logits = jnp.dot(x_ref[...], w_ref[...],
                             preferred_element_type=jnp.float32)
            stats = logits
            if needs_mask:
                col = jax.lax.broadcasted_iota(jnp.int32, (tm, tv), 1)
                stats = jnp.where(col < v_real, logits, -jnp.inf)
            m = jnp.max(stats, axis=-1, keepdims=True)
            lse = m + jnp.log(jnp.sum(jnp.exp(stats - m), axis=-1, keepdims=True))
            o_ref[...] = (logits - lse).astype(o_ref.dtype)
        return kernel

    def kernel(x_ref, w_ref, o_ref, m_sc, l_sc):
        v = pl.program_id(1)

        @pl.when(v == 0)
        def _init():
            m_sc[...] = jnp.full((tm, 1), -jnp.inf, dtype=jnp.float32)
            l_sc[...] = jnp.zeros((tm, 1), dtype=jnp.float32)

        # MXU matmul in native operand dtype, f32 accumulation.
        logits = jnp.dot(x_ref[...], w_ref[...], preferred_element_type=jnp.float32)

        stats = logits
        if needs_mask:
            col = jax.lax.broadcasted_iota(jnp.int32, (tm, tv), 1) + v * tv
            stats = jnp.where(col < v_real, logits, -jnp.inf)

        # Online max / sum-exp update across vocab tiles (f32).
        m_prev = m_sc[...]
        m_new = jnp.maximum(m_prev, jnp.max(stats, axis=-1, keepdims=True))
        l_sc[...] = (l_sc[...] * jnp.exp(m_prev - m_new)
                     + jnp.sum(jnp.exp(stats - m_new), axis=-1, keepdims=True))
        m_sc[...] = m_new

        # Stage raw logits straight into the resident output row block via a
        # lane-dense, 128-aligned dynamic column slice (no f32 staging scratch).
        off = pl.multiple_of(v * tv, 128)
        o_ref[:, pl.ds(off, tv)] = logits.astype(o_ref.dtype)

        @pl.when(v == nv - 1)
        def _finalize():
            lse = m_sc[...] + jnp.log(l_sc[...])          # (tm, 1) f32

            def body(j, carry):
                off_j = pl.multiple_of(j * tv, 128)
                tile = o_ref[:, pl.ds(off_j, tv)].astype(jnp.float32)
                o_ref[:, pl.ds(off_j, tv)] = (tile - lse).astype(o_ref.dtype)
                return carry

            jax.lax.fori_loop(0, nv, body, 0, unroll=min(nv, 4))

    return kernel


def _make_pass1_kernel(tm, tv, nv, v_real, v_pad):
    """Two-pass, pass 1: raw logit tiles + per-row lse (no resident (tm, V) block)."""
    needs_mask = v_pad != v_real

    def kernel(x_ref, w_ref, logits_ref, lse_ref, m_sc, l_sc):
        v = pl.program_id(1)

        @pl.when(v == 0)
        def _init():
            m_sc[...] = jnp.full((tm, 1), -jnp.inf, dtype=jnp.float32)
            l_sc[...] = jnp.zeros((tm, 1), dtype=jnp.float32)

        logits = jnp.dot(x_ref[...], w_ref[...], preferred_element_type=jnp.float32)

        stats = logits
        if needs_mask:
            col = jax.lax.broadcasted_iota(jnp.int32, (tm, tv), 1) + v * tv
            stats = jnp.where(col < v_real, logits, -jnp.inf)

        m_prev = m_sc[...]
        m_new = jnp.maximum(m_prev, jnp.max(stats, axis=-1, keepdims=True))
        l_sc[...] = (l_sc[...] * jnp.exp(m_prev - m_new)
                     + jnp.sum(jnp.exp(stats - m_new), axis=-1, keepdims=True))
        m_sc[...] = m_new

        logits_ref[...] = logits.astype(logits_ref.dtype)

        @pl.when(v == nv - 1)
        def _fin():
            lse_ref[...] = m_sc[...] + jnp.log(l_sc[...])

    return kernel


def _pass2_kernel(logits_ref, lse_ref, o_ref):
    """Two-pass, pass 2: trivial elementwise epilogue  out = logits - lse."""
    o_ref[...] = (logits_ref[...].astype(jnp.float32) - lse_ref[...]).astype(o_ref.dtype)


# ----------------------------- tiling / budgets ---------------------------- #

def _select_tiles(M, H, V, in_bytes, out_bytes, budget, tm_target, tv_target, two_pass):
    """Pick (tm, tv, V_pad, nv, two_pass) under a VMEM budget that accounts for the
    double-buffered x tile, weight tile and output block(s)."""
    lane = 128
    sub = max(8, 32 // min(in_bytes, out_bytes, 4))     # 8 (f32) / 16 (bf16) sublanes

    # Vocab tile: keep the double-buffered (H, tv) weight tile within ~budget/4.
    if tv_target is None:
        tv_target = 1024 if budget >= (80 << 20) else 512
    tv_cap = max(lane, ((budget // 4) // max(1, 2 * H * in_bytes)) // lane * lane)
    tv = min(tv_target, tv_cap)
    tv = max(lane, (tv // lane) * lane)
    tv = min(tv, _round_up(V, lane))
    v_pad = _round_up(V, tv)
    nv = v_pad // tv

    # Token tile.
    tm_cap = min(tm_target, _round_up(M, sub))
    if M >= 512:
        # Keep >= 2 token row blocks so the "parallel" axis can shard across the two
        # TensorCores on v7x (cheap no-op on 1-TC parts once M is large).
        tm_cap = min(tm_cap, _round_up(_cdiv(M, 2), sub))

    wbuf = 2 * H * tv * in_bytes                              # weight double buffer
    avail = max(0, budget - wbuf)
    row_single = 2 * H * in_bytes + 2 * v_pad * out_bytes + 16    # x dbuf + resident out dbuf + m/l
    row_p1 = 2 * H * in_bytes + 2 * tv * out_bytes + 8 + 16       # x dbuf + (tm,tv) out dbuf + lse + m/l
    tm_single = (avail // row_single) // sub * sub
    tm_p1 = (avail // row_p1) // sub * sub

    if two_pass is None:
        # Two-pass only pays off when the resident (tm, V) block clamps tm badly (large V).
        two_pass = nv > 1 and tm_single < min(256, tm_cap) and tm_p1 > tm_single
    two_pass = bool(two_pass)

    tm = tm_p1 if two_pass else tm_single
    tm = min(tm_cap, tm)
    if tm < sub:
        raise ValueError(
            "hidden/vocab size too large for the VMEM budget "
            f"(budget={budget} B, H={H}, V={V}); raise vmem_limit_bytes or pass "
            "two_pass=True.")
    return tm, tv, v_pad, nv, two_pass


# ----------------------------- wrapper ------------------------------------- #

def prepare_generator_weight(w_proj, dtype=None):
    """One-time weight prep: PyTorch nn.Linear weight [V, H] -> kernel layout [H, V].

    Pass dtype=jnp.bfloat16 to also cast the weight once at init: bf16 operands halve
    weight-stream HBM traffic and double effective MXU throughput (recommended on TPU);
    activations and (by default) the output follow the weight dtype."""
    w = jnp.asarray(w_proj)
    if dtype is not None:
        w = w.astype(dtype)
    return w.T


def generator_forward(x, w_t, *, out_dtype=None, tm_target=512, tv_target=None,
                      two_pass=None, vmem_limit_bytes=None):
    """log_softmax(x @ w_t, axis=-1).

    x: [..., H]; w_t: [H, V] pre-transposed weight (see prepare_generator_weight).
    Activations are cast to w_t.dtype (the MXU compute dtype); out_dtype defaults to that
    compute dtype, so a bf16-prepared weight yields a bf16 output (~2x less HBM traffic)."""
    *lead, H = x.shape
    H2, V = w_t.shape
    if H != H2:
        raise ValueError("hidden size mismatch between activations and weight")

    compute_dtype = w_t.dtype
    out_dtype = jnp.dtype(compute_dtype if out_dtype is None else out_dtype)
    in_bytes = jnp.dtype(compute_dtype).itemsize
    out_bytes = out_dtype.itemsize

    M = 1
    for d in lead:
        M *= int(d)
    M = max(M, 1)

    # Generation-aware VMEM budget (128 MiB parts -> ~100 MiB; v7x 64 MiB -> ~51 MiB).
    cap = _vmem_capacity_bytes()
    if vmem_limit_bytes is None:
        vmem_limit_bytes = min(int(cap * 0.80), cap - (8 << 20))
    vmem_limit_bytes = int(max(vmem_limit_bytes, 16 << 20))
    budget = max(vmem_limit_bytes - (4 << 20), 8 << 20)

    tm, tv, V_pad, nv, use_two_pass = _select_tiles(
        M, H, V, in_bytes, out_bytes, budget, tm_target, tv_target, two_pass)

    # Flatten tokens, cast to the compute dtype, pad rows to a tile multiple.
    x2d = x.reshape(M, H).astype(compute_dtype)
    M_pad = _round_up(M, tm)
    if M_pad != M:
        x2d = jnp.pad(x2d, ((0, M_pad - M), (0, 0)))
    # Pad vocab to the tile multiple; padded columns are masked to -inf in-kernel.
    w_pad = w_t if V_pad == V else jnp.pad(w_t, ((0, 0), (0, V_pad - V)))

    grid = (M_pad // tm, nv)
    cparams = pltpu.CompilerParams(
        dimension_semantics=("parallel", "arbitrary"),
        vmem_limit_bytes=vmem_limit_bytes)

    # TODO(synk): tile H with a third (reduction) grid axis + f32 acc scratch once H
    # exceeds ~8K so the x / weight tiles stay bounded on v7x's 64 MiB VMEM.
    if not use_two_pass:
        out2d = pl.pallas_call(
            _make_single_pass_kernel(tm, tv, nv, V, V_pad),
            out_shape=jax.ShapeDtypeStruct((M_pad, V_pad), out_dtype),
            grid_spec=pltpu.PrefetchScalarGridSpec(
                num_scalar_prefetch=0,
                grid=grid,
                in_specs=[
                    # Token tile: constant along the vocab axis -> fetched once per row block.
                    pl.BlockSpec((tm, H), lambda i, v: (i, 0)),
                    # Weight streams through VMEM one (H, tv) vocab tile at a time.
                    pl.BlockSpec((H, tv), lambda i, v: (0, v)),
                ],
                # Output row block stays resident in VMEM across the vocab sweep.
                out_specs=pl.BlockSpec((tm, V_pad), lambda i, v: (i, 0)),
                scratch_shapes=[
                    pltpu.VMEM((tm, 1), jnp.float32),   # running row max
                    pltpu.VMEM((tm, 1), jnp.float32),   # running sum(exp)
                ],
            ),
            compiler_params=cparams,
        )(x2d, w_pad)
    else:
        # Pass 1: stream the weight, write raw logit tiles + per-row lse.
        logits, lse = pl.pallas_call(
            _make_pass1_kernel(tm, tv, nv, V, V_pad),
            out_shape=(jax.ShapeDtypeStruct((M_pad, V_pad), out_dtype),
                       jax.ShapeDtypeStruct((M_pad, 1), jnp.float32)),
            grid_spec=pltpu.PrefetchScalarGridSpec(
                num_scalar_prefetch=0,
                grid=grid,
                in_specs=[
                    pl.BlockSpec((tm, H), lambda i, v: (i, 0)),
                    pl.BlockSpec((H, tv), lambda i, v: (0, v)),
                ],
                out_specs=[
                    pl.BlockSpec((tm, tv), lambda i, v: (i, v)),
                    pl.BlockSpec((tm, 1), lambda i, v: (i, 0)),
                ],
                scratch_shapes=[
                    pltpu.VMEM((tm, 1), jnp.float32),
                    pltpu.VMEM((tm, 1), jnp.float32),
                ],
            ),
            compiler_params=cparams,
        )(x2d, w_pad)

        # Pass 2: trivial elementwise epilogue.
        # TODO(synk): alias the logits buffer onto the output via input_output_aliases to
        # rewrite in place and save one (M, V) HBM allocation.
        out2d = pl.pallas_call(
            _pass2_kernel,
            out_shape=jax.ShapeDtypeStruct((M_pad, V_pad), out_dtype),
            grid_spec=pltpu.PrefetchScalarGridSpec(
                num_scalar_prefetch=0,
                grid=grid,
                in_specs=[
                    pl.BlockSpec((tm, tv), lambda i, v: (i, v)),
                    pl.BlockSpec((tm, 1), lambda i, v: (i, 0)),
                ],
                out_specs=pl.BlockSpec((tm, tv), lambda i, v: (i, v)),
            ),
            compiler_params=pltpu.CompilerParams(
                dimension_semantics=("parallel", "parallel"),
                vmem_limit_bytes=vmem_limit_bytes),
        )(logits, lse)

    return out2d[:M, :V].reshape(*lead, V)


# ----------------------------- demo / check -------------------------------- #

if __name__ == "__main__":
    key = jax.random.PRNGKey(0)
    k1, k2, k3, k4, k5, k6 = jax.random.split(key, 6)
    B, S = 2, 8

    # Config 1: single vocab tile (nv == 1), f32 end-to-end.
    H, V = 32, 128
    x = jax.random.normal(k1, (B, S, H), dtype=jnp.float32)
    w = jax.random.normal(k2, (V, H), dtype=jnp.float32) * 0.05   # nn.Linear layout [V, H]
    out = jax.block_until_ready(generator_forward(x, prepare_generator_weight(w)))
    ref = jax.nn.log_softmax(jnp.einsum("bsh,vh->bsv", x, w), axis=-1)
    assert out.shape == (B, S, V) and out.dtype == x.dtype
    assert jnp.allclose(out, ref, atol=1e-5, rtol=1e-5), "mismatch (single vocab tile)"

    # Config 2: streamed vocab tiles with a non-128-multiple vocab (pad + -inf mask path).
    H2, V2 = 64, 500
    x2 = jax.random.normal(k3, (B, S, H2), dtype=jnp.float32)
    w2 = jax.random.normal(k4, (V2, H2), dtype=jnp.float32) * 0.05
    out2 = jax.block_until_ready(
        generator_forward(x2, prepare_generator_weight(w2), tv_target=128))
    ref2 = jax.nn.log_softmax(jnp.einsum("bsh,vh->bsv", x2, w2), axis=-1)
    assert out2.shape == (B, S, V2)
    assert jnp.allclose(out2, ref2, atol=1e-4, rtol=1e-4), "mismatch (masked vocab tiles)"

    # Config 3: forced two-pass (large-vocab) path, bf16 weights/activations/output.
    H3, V3 = 64, 512
    x3 = jax.random.normal(k5, (B, S, H3), dtype=jnp.float32)
    w3 = jax.random.normal(k6, (V3, H3), dtype=jnp.float32) * 0.05
    wt3 = prepare_generator_weight(w3, dtype=jnp.bfloat16)
    out3 = jax.block_until_ready(
        generator_forward(x3, wt3, tv_target=128, two_pass=True))
    xb = x3.astype(jnp.bfloat16).astype(jnp.float32)
    ref3 = jax.nn.log_softmax(jnp.einsum("bsh,hv->bsv", xb, wt3.astype(jnp.float32)), axis=-1)
    assert out3.shape == (B, S, V3) and out3.dtype == jnp.bfloat16
    assert jnp.allclose(out3.astype(jnp.float32), ref3, atol=1e-1), "mismatch (two-pass bf16)"

    print("KERNEL_OK")
</pallas_src>

<mosaic_0001>
module attributes {stable_mosaic.version = 11 : i64} {
  func.func @kernel(%arg0: i32, %arg1: i32, %arg2: memref<16x32xf32, #tpu.memory_space<vmem>>, %arg3: memref<32x128xf32, #tpu.memory_space<vmem>>, %arg4: memref<16x128xf32, #tpu.memory_space<vmem>>, %arg5: memref<16x1xf32, #tpu.memory_space<vmem>>, %arg6: memref<16x1xf32, #tpu.memory_space<vmem>>) attributes {dimension_semantics = [#tpu.dimension_semantics<parallel>, #tpu.dimension_semantics<arbitrary>], iteration_bounds = array<i64: 1, 1>, scalar_prefetch = 0 : i64, scratch_operands = 2 : i64, tpu.core_type = #tpu.core_type<tc>, window_params = [{transform_indices = @transform_0, window_bounds = array<i64: 16, 32>}, {transform_indices = @transform_1, window_bounds = array<i64: 32, 128>}, {transform_indices = @transform_2, window_bounds = array<i64: 16, 128>}]} {
    %c0 = arith.constant 0 : index
    %c0_0 = arith.constant 0 : index
    %0 = vector.load %arg2[%c0, %c0_0] : memref<16x32xf32, #tpu.memory_space<vmem>>, vector<16x32xf32>
    %c0_1 = arith.constant 0 : index
    %c0_2 = arith.constant 0 : index
    %1 = vector.load %arg3[%c0_1, %c0_2] : memref<32x128xf32, #tpu.memory_space<vmem>>, vector<32x128xf32>
    %cst = arith.constant dense<0.000000e+00> : vector<16x128xf32>
    %2 = tpu.matmul %0, %1, %cst {dimension_numbers = #tpu.dot_dimension_numbers<[1], [0], [0], [1], [0, 0, 1, 1], [], []>} : vector<16x32xf32>, vector<32x128xf32>, vector<16x128xf32> -> vector<16x128xf32>
    %cst_3 = arith.constant dense<0xFF800000> : vector<16xf32>
    %3 = vector.multi_reduction <maximumf>, %2, %cst_3 [1] : vector<16x128xf32> to vector<16xf32>
    %4 = vector.shape_cast %3 : vector<16xf32> to vector<16x1xf32>
    %5 = vector.broadcast %4 : vector<16x1xf32> to vector<16x128xf32>
    %6 = arith.subf %2, %5 : vector<16x128xf32>
    %7 = math.exp %6 : vector<16x128xf32>
    %cst_4 = arith.constant dense<0.000000e+00> : vector<16xf32>
    %8 = vector.multi_reduction <add>, %7, %cst_4 [1] : vector<16x128xf32> to vector<16xf32>
    %9 = vector.shape_cast %8 : vector<16xf32> to vector<16x1xf32>
    %10 = math.log %9 : vector<16x1xf32>
    %11 = arith.addf %4, %10 : vector<16x1xf32>
    %12 = vector.broadcast %11 : vector<16x1xf32> to vector<16x128xf32>
    %13 = arith.subf %2, %12 : vector<16x128xf32>
    %c0_5 = arith.constant 0 : index
    %c0_6 = arith.constant 0 : index
    %14 = vector.load %arg4[%c0_5, %c0_6] : memref<16x128xf32, #tpu.memory_space<vmem>>, vector<16x128xf32>
    tpu.vector_store %arg4[%c0_5, %c0_6], %13 {strides = array<i32>} : memref<16x128xf32, #tpu.memory_space<vmem>>, vector<16x128xf32>,
    return
  }
  func.func @transform_0(%arg0: i32, %arg1: i32) -> (i32, i32) {
    %c0_i32 = arith.constant 0 : i32
    %c0_i32_0 = arith.constant 0 : i32
    return %arg0, %c0_i32 : i32, i32
  }
  func.func @transform_1(%arg0: i32, %arg1: i32) -> (i32, i32) {
    %c0_i32 = arith.constant 0 : i32
    %c0_i32_0 = arith.constant 0 : i32
    return %c0_i32, %arg1 : i32, i32
  }
  func.func @transform_2(%arg0: i32, %arg1: i32) -> (i32, i32) {
    %c0_i32 = arith.constant 0 : i32
    %c0_i32_0 = arith.constant 0 : i32
    return %arg0, %c0_i32 : i32, i32
  }
}

</mosaic_0001>

<llo_original>
// kernel: tpu_custom_call.1
$region0: #{tpu_custom_call.1}
  #allocation0 [shape = 'u32[]', space=smem, size = 0x4, offset = 0x4, fixed_abs, tag = 'smem constant byte address 0x4 - core index']
  #allocation1 [shape = 'u32[144,128]{1,0:T(1,128)}', space=vmem, size = 0x12000, scoped, tag = 'internal scratch']
  #allocation2 [shape = 'f32[16,1]{1,0:T(8,128)}', space=vmem, size = 0x2000, scoped, tag = 'scratch operand']
  #allocation3 [shape = 'f32[16,1]{1,0:T(8,128)}', space=vmem, size = 0x2000, scoped, tag = 'scratch operand']
  %s0 = inlined_call_operand.hbm [shape: f32[16,32], index: 0, kind: input, shape index: {}]
  %s1 = inlined_call_operand.hbm [shape: f32[32,128], index: 1, kind: input, shape index: {}]
  %s2 = inlined_call_operand.hbm [shape: f32[16,128], index: 2, kind: output, shape index: {}]
  %s3 = sld [smem:[#allocation0]]
  $region26: #{tpu_custom_call.1} parent=0
    _
  %s5 = ssub.s32 1, %s3
  %s6 = scalar_select 0, %s5, %s3
  $region1: #{tpu_custom_call.1} parent=0
    #allocation4 [shape = 'u8[8192]{0}', space=vmem, size = 0x2000, scoped, tag = 'input window, operand 0, single buffered']
    #allocation5 [shape = 's32[1]{0}', space=sflag, size = 0x4, scoped, tag = 'scoped memory for tpu_custom_call.1']
    #allocation6 [shape = 's32[1]{0}', space=sflag, size = 0x4, scoped, tag = 'scoped memory for tpu_custom_call.1']
    #allocation7 [shape = 'u8[16384]{0}', space=vmem, size = 0x4000, scoped, tag = 'input window, operand 1, single buffered']
    #allocation8 [shape = 's32[1]{0}', space=sflag, size = 0x4, scoped, tag = 'scoped memory for tpu_custom_call.1']
    #allocation9 [shape = 'u8[8192]{0}', space=vmem, size = 0x2000, scoped, tag = 'output window, operand 0, single buffered']
    %7 = vsyncpa [#allocation5], 0
    %8 = vsyncpa [#allocation8], 0
    %9 = vsyncpa [#allocation6], 0
    // Predicated region
    $region2: #{tpu_custom_call.1} parent=1 // pred_check
      _
    $region3: #{tpu_custom_call.1} parent=1 // pred_check_branch
      %11 = sbr.rel (0) target = $region5
    $region4: #{tpu_custom_call.1} parent=1 // pred_region
      %s13 = ssub.s32 256, 256
      %14 = vsyncadd [#allocation5], %s13
      %s15 = sshll.u32 [#allocation4], 4
      %s16 = int_to_ptr.vmem [resolvable:$true] %s15
      %21 = dma.hbm_to_vmem [thread:$0]  %s0, 256, %s16, [#allocation5], 128, 128, 8
    $region5: #{tpu_custom_call.1} parent=1 // pred_fallthru
      _
    // Predicated region
    $region6: #{tpu_custom_call.1} parent=1 // pred_check
      _
    $region7: #{tpu_custom_call.1} parent=1 // pred_check_branch
      %23 = sbr.rel (0) target = $region9
    $region8: #{tpu_custom_call.1} parent=1 // pred_region
      %s25 = ssub.s32 512, 512
      %26 = vsyncadd [#allocation8], %s25
      %s27 = sshll.u32 [#allocation7], 4
      %s28 = int_to_ptr.vmem [resolvable:$true] %s27
      %33 = dma.hbm_to_vmem [thread:$0]  %s1, 512, %s28, [#allocation8], 128, 128, 8
    $region9: #{tpu_custom_call.1} parent=1 // pred_fallthru
      _
    // Predicated region
    $region10: #{tpu_custom_call.1} parent=1 // pred_check
      _
    $region11: #{tpu_custom_call.1} parent=1 // pred_check_branch
      %35 = sbr.rel (0) target = $region13
    $region12: #{tpu_custom_call.1} parent=1 // pred_region
      %36 = dma.done [#allocation5], 256
    $region13: #{tpu_custom_call.1} parent=1 // pred_fallthru
      _
    // Predicated region
    $region14: #{tpu_custom_call.1} parent=1 // pred_check
      _
    $region15: #{tpu_custom_call.1} parent=1 // pred_check_branch
      %38 = sbr.rel (0) target = $region17
    $region16: #{tpu_custom_call.1} parent=1 // pred_region
      %39 = dma.done [#allocation8], 512
    $region17: #{tpu_custom_call.1} parent=1 // pred_fallthru
      _
    %v40 = vld [vmem:[#allocation4] sm:$0xff]
    %v41 = vld [vmem:[#allocation4 + $0x8] sm:$0xff]
    %v42 = vld [vmem:[#allocation7] sm:$0xff]
    %v43 = vld [vmem:[#allocation7 + $0x8] sm:$0xff]
    %v44 = vld [vmem:[#allocation7 + $0x10] sm:$0xff]
    %v45 = vld [vmem:[#allocation7 + $0x18] sm:$0xff]
    %vm46 = vcmask 261120
    %v48 = vsel %vm46, %v40, 0
    %v51 = vsel %vm46, %v41, 0
    %53 = vmatprep.subr.mxu0 0.0
    %54 = vmatpush1.msra.mxu0 0.0
    %55 = vmatprep.subr.mxu0 0.0
    %56 = vmatpush1.msra.mxu0 0.0
    %57 = vmatprep.subr.mxu0 0.0
    %58 = vmatpush1.msra.mxu0 0.0
    %59 = vmatprep.subr.mxu0 0.0
    %60 = vmatpush1.msra.mxu0 0.0
    %61 = vmatprep.subr.mxu0 0.0
    %62 = vmatpush1.msra.mxu0 0.0
    %63 = vmatprep.subr.mxu0 0.0
    %64 = vmatpush1.msra.mxu0 0.0
    %65 = vmatprep.subr.mxu0 0.0
    %66 = vmatpush1.msra.mxu0 0.0
    %67 = vmatprep.subr.mxu0 0.0
    %68 = vmatpush1.msra.mxu0 0.0
    %69 = vmatprep.subr.mxu0 0.0
    %70 = vmatpush1.msra.mxu0 0.0
    %71 = vmatprep.subr.mxu0 0.0
    %72 = vmatpush1.msra.mxu0 0.0
    %73 = vmatprep.subr.mxu0 0.0
    %74 = vmatpush1.msra.mxu0 0.0
    %75 = vmatprep.subr.mxu0 0.0
    %76 = vmatpush1.msra.mxu0 0.0
    %77 = vmatprep.subr.mxu0 0.0
    %78 = vmatpush1.msra.mxu0 %v45
    %79 = vmatprep.subr.mxu0 0.0
    %80 = vmatpush1.msra.mxu0 %v44
    %81 = vmatprep.subr.mxu0 0.0
    %82 = vmatpush1.msra.mxu0 %v43
    %83 = vmatprep.subr.mxu0 0.0
    %84 = vmatpush1.msra.mxu0 %v42
    %85 = vmatprep.subr.mxu0 0.0
    %86 = vmatpush2.msra.mxu0 0.0
    %87 = vmatprep.subr.mxu0 0.0
    %88 = vmatpush2.msra.mxu0 0.0
    %89 = vmatprep.subr.mxu0 0.0
    %90 = vmatpush2.msra.mxu0 0.0
    %91 = vmatprep.subr.mxu0 0.0
    %92 = vmatpush2.msra.mxu0 0.0
    %93 = vmatprep.subr.mxu0 0.0
    %94 = vmatpush2.msra.mxu0 0.0
    %95 = vmatprep.subr.mxu0 0.0
    %96 = vmatpush2.msra.mxu0 0.0
    %97 = vmatprep.subr.mxu0 0.0
    %98 = vmatpush2.msra.mxu0 0.0
    %99 = vmatprep.subr.mxu0 0.0
    %100 = vmatpush2.msra.mxu0 0.0
    %101 = vmatprep.subr.mxu0 0.0
    %102 = vmatpush2.msra.mxu0 0.0
    %103 = vmatprep.subr.mxu0 0.0
    %104 = vmatpush2.msra.mxu0 0.0
    %105 = vmatprep.subr.mxu0 0.0
    %106 = vmatpush2.msra.mxu0 0.0
    %107 = vmatprep.subr.mxu0 0.0
    %108 = vmatpush2.msra.mxu0 0.0
    %109 = vmatprep.subr.mxu0 0.0
    %110 = vmatpush2.msra.mxu0 0.0
    %111 = vmatprep.subr.mxu0 0.0
    %112 = vmatpush2.msra.mxu0 0.0
    %113 = vmatprep.subr.mxu0 0.0
    %114 = vmatpush2.msra.mxu0 0.0
    %115 = vmatprep.subr.mxu0 0.0
    %116 = vmatpush2.msra.mxu0 0.0
    %117 = vmatprep.mubr.f32.mxu0 0.0
    %118 = vmatmul.mubr.f32.gmra.mxu0 %v48
    %v119 = vpop.f32.mrf.mxu0
    %v120 = vadd.f32 0.0, %v119
    %v121 = vpop.f32.mrf.mxu0
    %122 = vmatprep.mubr.f32.mxu0 0.0
    %123 = vmatmul.mubr.f32.gmra.mxu0 %v51
    %v124 = vpop.f32.mrf.mxu0
    %v125 = vadd.f32 0.0, %v124
    %v126 = vpop.f32.mrf.mxu0
    %127 = vdwg.mxu0
    %128 = vmax.xlane.f32.xlu0 %v120
    %v129 = vpop.xlane.xlu0 %128
    %130 = vmax.xlane.f32.xlu0 %v125
    %v131 = vpop.xlane.xlu0 %130
    %v132 = vsub.f32 %v120, %v129
    %v133 = vsub.f32 %v125, %v131
    %v134 = vmul.f32 %v132, 1.442695
    %v135 = vpow.pop %v134
    %v136 = vmul.f32 %v133, 1.442695
    %v137 = vpow.pop %v136
    %138 = vadd.xlane.f32.xlu0 %v135
    %v139 = vpop.xlane.xlu0 %138
    %140 = vadd.xlane.f32.xlu0 %v137
    %v141 = vpop.xlane.xlu0 %140
    %v142 = vlog2.pop %v139
    %v143 = vmul.f32 %v142, 0.6931472
    %v144 = vlog2.pop %v141
    %v145 = vmul.f32 %v144, 0.6931472
    %v146 = vadd.f32 %v129, %v143
    %v147 = vadd.f32 %v131, %v145
    %v148 = vsub.f32 %v120, %v146
    %v149 = vsub.f32 %v125, %v147
    %150 = vst [vmem:[#allocation9] sm:$0xff] %v148
    %151 = vst [vmem:[#allocation9 + $0x8] sm:$0xff] %v149
    // Predicated region
    $region18: #{tpu_custom_call.1} parent=1 // pred_check
      _
    $region19: #{tpu_custom_call.1} parent=1 // pred_check_branch
      %153 = sbr.rel (0) target = $region21
    $region20: #{tpu_custom_call.1} parent=1 // pred_region
      %s155 = ssub.s32 256, 256
      %156 = vsyncadd [#allocation6], %s155
      %s157 = sshll.u32 [#allocation9], 4
      %s158 = int_to_ptr.vmem [resolvable:$true] %s157
      %163 = dma.vmem_to_hbm [thread:$0]  %s158, 256, %s2, [#allocation6], 128, 128, 8
    $region21: #{tpu_custom_call.1} parent=1 // pred_fallthru
      _
    // Predicated region
    $region22: #{tpu_custom_call.1} parent=1 // pred_check
      _
    $region23: #{tpu_custom_call.1} parent=1 // pred_check_branch
      %165 = sbr.rel (0) target = $region25
    $region24: #{tpu_custom_call.1} parent=1 // pred_region
      %166 = dma.done [#allocation6], 256
    $region25: #{tpu_custom_call.1} parent=1 // pred_fallthru
      _
    %167 = vsyncpa [#allocation5], 1
    %168 = vsyncpa [#allocation8], 1
    %169 = vsyncpa [#allocation6], 1

</llo_original>
